<compile_context>
chip_gen: v7x
topology: tpu7x:2x2x1
jax: 0.10.0
libtpu: 0.0.40
codegen_flags: <defaults>
</compile_context>

<pallas_src>
import functools

import jax
import jax.numpy as jnp
from jax.experimental import pallas as pl
from jax.experimental.pallas import tpu as pltpu


def _round_up(n, m):
    return ((n + m - 1) // m) * m


def _cdiv(a, b):
    return -(-a // b)


def _pad_axis(a, axis, target):
    pad = target - a.shape[axis]
    if pad <= 0:
        return a
    widths = [(0, 0)] * a.ndim
    widths[axis] = (0, pad)
    return jnp.pad(a, widths)


# --------------------------- kernel ----------------------------------------

def actor_kernel(x_ref, w1_ref, b1_ref, w2_ref, b2_ref, w3_ref, b3_ref, o_ref):
    # fc1 + ReLU (bf16 operands on the MXU, f32 accumulate / elementwise)
    h1 = jnp.dot(x_ref[...], w1_ref[...], preferred_element_type=jnp.float32)
    h1 = jnp.maximum(h1 + b1_ref[...], 0.0)
    # fc2 + ReLU
    h2 = jnp.dot(h1.astype(jnp.bfloat16), w2_ref[...],
                 preferred_element_type=jnp.float32)
    h2 = jnp.maximum(h2 + b2_ref[...], 0.0)
    # output layer + tanh (tanh goes to the EUP slot)
    h3 = jnp.dot(h2.astype(jnp.bfloat16), w3_ref[...],
                 preferred_element_type=jnp.float32)
    o_ref[...] = jnp.tanh(h3 + b3_ref[...]).astype(o_ref.dtype)


# --------------------------- parameter packing ------------------------------

def pack_actor_params(w1, b1, w2, b2, w3, b3):
    """Pad to lane multiples of 128 and cast weights to bf16, ONCE.

    Weights are stored transposed vs. PyTorch, i.e. (in, out), so the kernel
    computes y = x @ W + b directly.  Call this once and reuse the result for
    every forward pass.
    """
    h1_dim = w1.shape[1]
    h2_dim = w2.shape[1]
    num_actions = w3.shape[1]

    h1_p = _round_up(h1_dim, 128)        # 400 -> 512
    h2_p = _round_up(h2_dim, 128)        # 300 -> 384 (3x128)
    act_p = _round_up(num_actions, 128)  # e.g. 2 -> 128 (lane-dense store)

    w1_p = _pad_axis(w1, 1, h1_p).astype(jnp.bfloat16)
    b1_p = _pad_axis(b1.reshape(1, -1), 1, h1_p).astype(jnp.float32)
    w2_p = _pad_axis(_pad_axis(w2, 0, h1_p), 1, h2_p).astype(jnp.bfloat16)
    b2_p = _pad_axis(b2.reshape(1, -1), 1, h2_p).astype(jnp.float32)
    w3_p = _pad_axis(_pad_axis(w3, 0, h2_p), 1, act_p).astype(jnp.bfloat16)
    b3_p = _pad_axis(b3.reshape(1, -1), 1, act_p).astype(jnp.float32)

    packed = (w1_p, b1_p, w2_p, b2_p, w3_p, b3_p)
    return packed, num_actions


# --------------------------- forward ----------------------------------------

_TB_MAX = 1024  # max batch rows per grid step


@functools.partial(jax.jit, static_argnames=("num_actions",))
def actor_forward(x, packed_params, *, num_actions):
    w1_p, b1_p, w2_p, b2_p, w3_p, b3_p = packed_params
    batch, state_dim = x.shape
    h1_p = w1_p.shape[1]
    h2_p = w2_p.shape[1]
    act_p = w3_p.shape[1]

    # Balanced batch tiles (<= _TB_MAX rows, sublane-aligned).  Keep >= 2
    # tiles whenever the batch allows so the "parallel" axis shards across
    # both TensorCores on v7x; the extra grid step is negligible elsewhere.
    bp8 = _round_up(batch, 8)
    num_tiles = _cdiv(bp8, _TB_MAX)
    if bp8 >= 16:
        num_tiles = max(num_tiles, 2)
    tb = _round_up(_cdiv(bp8, num_tiles), 8)
    num_tiles = _cdiv(bp8, tb)
    bp = tb * num_tiles

    # Only the activations are padded/cast per call.
    x_p = _pad_axis(x, 0, bp).astype(jnp.bfloat16)

    resident = lambda i: (0, 0)   # weights/biases: same block every step
    tiled = lambda i: (i, 0)      # x / output: march along the batch

    cost = pl.CostEstimate(
        flops=2 * bp * (state_dim * h1_p + h1_p * h2_p + h2_p * act_p),
        transcendentals=bp * act_p,
        bytes_accessed=(x_p.size * 2
                        + (w1_p.size + w2_p.size + w3_p.size) * 2
                        + (h1_p + h2_p + act_p) * 4
                        + bp * act_p * 2),
    )

    out_padded = pl.pallas_call(
        actor_kernel,
        out_shape=jax.ShapeDtypeStruct((bp, act_p), jnp.bfloat16),
        grid=(num_tiles,),
        in_specs=[
            pl.BlockSpec((tb, state_dim), tiled),
            pl.BlockSpec((state_dim, h1_p), resident),
            pl.BlockSpec((1, h1_p), resident),
            pl.BlockSpec((h1_p, h2_p), resident),
            pl.BlockSpec((1, h2_p), resident),
            pl.BlockSpec((h2_p, act_p), resident),
            pl.BlockSpec((1, act_p), resident),
        ],
        out_specs=pl.BlockSpec((tb, act_p), tiled),
        compiler_params=pltpu.CompilerParams(
            dimension_semantics=("parallel",),
            vmem_limit_bytes=32 * 1024 * 1024),
        cost_estimate=cost,
    )(x_p, w1_p, b1_p, w2_p, b2_p, w3_p, b3_p)

    # Slice padding off; cast the tiny unpadded result back to f32 to match
    # the PyTorch module's output dtype.
    return out_padded[:batch, :num_actions].astype(jnp.float32)


# --------------------------- init (mirrors PyTorch __init__) ----------------

def init_actor_params(key, state_dim, num_actions):
    """Deterministic init mirroring the PyTorch module's __init__."""
    k1, k2, k3, k4, k5, k6 = jax.random.split(key, 6)

    # fc1: weight ~ U(-1/sqrt(fanin), 1/sqrt(fanin)) (init_fanin)
    v1 = 1.0 / jnp.sqrt(jnp.float32(state_dim))
    w1 = jax.random.uniform(k1, (state_dim, 400), jnp.float32, -v1, v1)
    b1 = jax.random.uniform(k2, (1, 400), jnp.float32, -v1, v1)

    # fc2
    v2 = 1.0 / jnp.sqrt(jnp.float32(400))
    w2 = jax.random.uniform(k3, (400, 300), jnp.float32, -v2, v2)
    b2 = jax.random.uniform(k4, (1, 300), jnp.float32, -v2, v2)

    # output layer: U(-0.003, 0.003) for both weight and bias
    w3 = jax.random.uniform(k5, (300, num_actions), jnp.float32, -0.003, 0.003)
    b3 = jax.random.uniform(k6, (1, num_actions), jnp.float32, -0.003, 0.003)

    return w1, b1, w2, b2, w3, b3


if __name__ == "__main__":
    state_dim = 4      # e.g. CartPole
    num_actions = 2
    batch = 2

    key = jax.random.PRNGKey(0)
    key_x, key_p = jax.random.split(key)

    x = jax.random.normal(key_x, (batch, state_dim), jnp.float32)
    w1, b1, w2, b2, w3, b3 = init_actor_params(key_p, state_dim, num_actions)

    # Pack (pad + bf16 cast) the parameters exactly once.
    packed, n_act = pack_actor_params(w1, b1, w2, b2, w3, b3)
    packed = jax.block_until_ready(packed)

    action = actor_forward(x, packed, num_actions=n_act)
    action = jax.block_until_ready(action)

    # Pure-JAX f32 reference of the same math (kernel uses bf16 weights /
    # activations with f32 accumulation -> small mixed-precision tolerance).
    ref = jnp.maximum(x @ w1 + b1, 0.0)
    ref = jnp.maximum(ref @ w2 + b2, 0.0)
    ref = jnp.tanh(ref @ w3 + b3)

    assert action.shape == (batch, num_actions)
    assert action.dtype == jnp.float32
    assert jnp.allclose(action, ref, atol=2e-2, rtol=2e-2), (
        f"max abs err {jnp.max(jnp.abs(action - ref))}")

    print("KERNEL_OK")
</pallas_src>

<mosaic_0001>
module attributes {stable_mosaic.version = 11 : i64} {
  func.func @actor_kernel(%arg0: i32, %arg1: memref<8x4xbf16, #tpu.memory_space<vmem>>, %arg2: memref<4x512xbf16, #tpu.memory_space<vmem>>, %arg3: memref<1x512xf32, #tpu.memory_space<vmem>>, %arg4: memref<512x384xbf16, #tpu.memory_space<vmem>>, %arg5: memref<1x384xf32, #tpu.memory_space<vmem>>, %arg6: memref<384x128xbf16, #tpu.memory_space<vmem>>, %arg7: memref<1x128xf32, #tpu.memory_space<vmem>>, %arg8: memref<8x128xbf16, #tpu.memory_space<vmem>>) attributes {dimension_semantics = [#tpu.dimension_semantics<parallel>], iteration_bounds = array<i64: 1>, scalar_prefetch = 0 : i64, scratch_operands = 0 : i64, tpu.core_type = #tpu.core_type<tc>, window_params = [{transform_indices = @transform_0, window_bounds = array<i64: 8, 4>}, {pipeline_mode = #tpu.pipeline_mode<synchronous>, transform_indices = @transform_1, window_bounds = array<i64: 4, 512>}, {pipeline_mode = #tpu.pipeline_mode<synchronous>, transform_indices = @transform_2, window_bounds = array<i64: 1, 512>}, {pipeline_mode = #tpu.pipeline_mode<synchronous>, transform_indices = @transform_3, window_bounds = array<i64: 512, 384>}, {pipeline_mode = #tpu.pipeline_mode<synchronous>, transform_indices = @transform_4, window_bounds = array<i64: 1, 384>}, {pipeline_mode = #tpu.pipeline_mode<synchronous>, transform_indices = @transform_5, window_bounds = array<i64: 384, 128>}, {pipeline_mode = #tpu.pipeline_mode<synchronous>, transform_indices = @transform_6, window_bounds = array<i64: 1, 128>}, {transform_indices = @transform_7, window_bounds = array<i64: 8, 128>}]} {
    %c0 = arith.constant 0 : index
    %c0_0 = arith.constant 0 : index
    %0 = vector.load %arg1[%c0, %c0_0] : memref<8x4xbf16, #tpu.memory_space<vmem>>, vector<8x4xbf16>
    %c0_1 = arith.constant 0 : index
    %c0_2 = arith.constant 0 : index
    %1 = vector.load %arg2[%c0_1, %c0_2] : memref<4x512xbf16, #tpu.memory_space<vmem>>, vector<4x512xbf16>
    %cst = arith.constant dense<0.000000e+00> : vector<8x512xf32>
    %2 = tpu.matmul %0, %1, %cst {dimension_numbers = #tpu.dot_dimension_numbers<[1], [0], [0], [1], [0, 0, 1, 1], [], []>} : vector<8x4xbf16>, vector<4x512xbf16>, vector<8x512xf32> -> vector<8x512xf32>
    %c0_3 = arith.constant 0 : index
    %c0_4 = arith.constant 0 : index
    %3 = vector.load %arg3[%c0_3, %c0_4] : memref<1x512xf32, #tpu.memory_space<vmem>>, vector<1x512xf32>
    %4 = vector.broadcast %3 : vector<1x512xf32> to vector<8x512xf32>
    %5 = arith.addf %2, %4 : vector<8x512xf32>
    %cst_5 = arith.constant 0.000000e+00 : f32
    %6 = vector.broadcast %cst_5 : f32 to vector<8x512xf32>
    %7 = arith.maximumf %5, %6 : vector<8x512xf32>
    %8 = arith.truncf %7 : vector<8x512xf32> to vector<8x512xbf16>
    %c0_6 = arith.constant 0 : index
    %c0_7 = arith.constant 0 : index
    %9 = vector.load %arg4[%c0_6, %c0_7] : memref<512x384xbf16, #tpu.memory_space<vmem>>, vector<512x384xbf16>
    %cst_8 = arith.constant dense<0.000000e+00> : vector<8x384xf32>
    %10 = tpu.matmul %8, %9, %cst_8 {dimension_numbers = #tpu.dot_dimension_numbers<[1], [0], [0], [1], [0, 0, 1, 1], [], []>} : vector<8x512xbf16>, vector<512x384xbf16>, vector<8x384xf32> -> vector<8x384xf32>
    %c0_9 = arith.constant 0 : index
    %c0_10 = arith.constant 0 : index
    %11 = vector.load %arg5[%c0_9, %c0_10] : memref<1x384xf32, #tpu.memory_space<vmem>>, vector<1x384xf32>
    %12 = vector.broadcast %11 : vector<1x384xf32> to vector<8x384xf32>
    %13 = arith.addf %10, %12 : vector<8x384xf32>
    %cst_11 = arith.constant 0.000000e+00 : f32
    %14 = vector.broadcast %cst_11 : f32 to vector<8x384xf32>
    %15 = arith.maximumf %13, %14 : vector<8x384xf32>
    %16 = arith.truncf %15 : vector<8x384xf32> to vector<8x384xbf16>
    %c0_12 = arith.constant 0 : index
    %c0_13 = arith.constant 0 : index
    %17 = vector.load %arg6[%c0_12, %c0_13] : memref<384x128xbf16, #tpu.memory_space<vmem>>, vector<384x128xbf16>
    %cst_14 = arith.constant dense<0.000000e+00> : vector<8x128xf32>
    %18 = tpu.matmul %16, %17, %cst_14 {dimension_numbers = #tpu.dot_dimension_numbers<[1], [0], [0], [1], [0, 0, 1, 1], [], []>} : vector<8x384xbf16>, vector<384x128xbf16>, vector<8x128xf32> -> vector<8x128xf32>
    %c0_15 = arith.constant 0 : index
    %c0_16 = arith.constant 0 : index
    %19 = vector.load %arg7[%c0_15, %c0_16] : memref<1x128xf32, #tpu.memory_space<vmem>>, vector<1x128xf32>
    %20 = vector.broadcast %19 : vector<1x128xf32> to vector<8x128xf32>
    %21 = arith.addf %18, %20 : vector<8x128xf32>
    %22 = math.tanh %21 : vector<8x128xf32>
    %23 = arith.truncf %22 : vector<8x128xf32> to vector<8x128xbf16>
    %c0_17 = arith.constant 0 : index
    %c0_18 = arith.constant 0 : index
    %24 = vector.load %arg8[%c0_17, %c0_18] : memref<8x128xbf16, #tpu.memory_space<vmem>>, vector<8x128xbf16>
    tpu.vector_store %arg8[%c0_17, %c0_18], %23 {strides = array<i32>} : memref<8x128xbf16, #tpu.memory_space<vmem>>, vector<8x128xbf16>,
    return
  }
  func.func @transform_0(%arg0: i32) -> (i32, i32) {
    %c0_i32 = arith.constant 0 : i32
    %c0_i32_0 = arith.constant 0 : i32
    return %arg0, %c0_i32 : i32, i32
  }
  func.func @transform_1(%arg0: i32) -> (i32, i32) {
    %c0_i32 = arith.constant 0 : i32
    %c0_i32_0 = arith.constant 0 : i32
    %c0_i32_1 = arith.constant 0 : i32
    return %c0_i32, %c0_i32_0 : i32, i32
  }
  func.func @transform_2(%arg0: i32) -> (i32, i32) {
    %c0_i32 = arith.constant 0 : i32
    %c0_i32_0 = arith.constant 0 : i32
    %c0_i32_1 = arith.constant 0 : i32
    return %c0_i32, %c0_i32_0 : i32, i32
  }
  func.func @transform_3(%arg0: i32) -> (i32, i32) {
    %c0_i32 = arith.constant 0 : i32
    %c0_i32_0 = arith.constant 0 : i32
    %c0_i32_1 = arith.constant 0 : i32
    return %c0_i32, %c0_i32_0 : i32, i32
  }
  func.func @transform_4(%arg0: i32) -> (i32, i32) {
    %c0_i32 = arith.constant 0 : i32
    %c0_i32_0 = arith.constant 0 : i32
    %c0_i32_1 = arith.constant 0 : i32
    return %c0_i32, %c0_i32_0 : i32, i32
  }
  func.func @transform_5(%arg0: i32) -> (i32, i32) {
    %c0_i32 = arith.constant 0 : i32
    %c0_i32_0 = arith.constant 0 : i32
    %c0_i32_1 = arith.constant 0 : i32
    return %c0_i32, %c0_i32_0 : i32, i32
  }
  func.func @transform_6(%arg0: i32) -> (i32, i32) {
    %c0_i32 = arith.constant 0 : i32
    %c0_i32_0 = arith.constant 0 : i32
    %c0_i32_1 = arith.constant 0 : i32
    return %c0_i32, %c0_i32_0 : i32, i32
  }
  func.func @transform_7(%arg0: i32) -> (i32, i32) {
    %c0_i32 = arith.constant 0 : i32
    %c0_i32_0 = arith.constant 0 : i32
    return %arg0, %c0_i32 : i32, i32
  }
}

</mosaic_0001>

<llo_original>
// kernel: actor_forward.1
$region0: #{actor_forward.1}
  #allocation0 [shape = 'u32[]', space=smem, size = 0x4, offset = 0x4, fixed_abs, tag = 'smem constant byte address 0x4 - core index']
  #allocation1 [shape = 'u32[144,128]{1,0:T(1,128)}', space=vmem, size = 0x12000, scoped, tag = 'internal scratch']
  %s0 = inlined_call_operand.vmem [shape: bf16[8,4], index: 0, kind: input, shape index: {}]
  %s1 = inlined_call_operand.vmem [shape: bf16[4,512], index: 1, kind: input, shape index: {}]
  %s2 = inlined_call_operand.vmem [shape: f32[1,512], index: 2, kind: input, shape index: {}]
  %s3 = inlined_call_operand.hbm [shape: bf16[512,384], index: 3, kind: input, shape index: {}]
  %s4 = inlined_call_operand.vmem [shape: f32[1,384], index: 4, kind: input, shape index: {}]
  %s5 = inlined_call_operand.hbm [shape: bf16[384,128], index: 5, kind: input, shape index: {}]
  %s6 = inlined_call_operand.vmem [shape: f32[1,128], index: 6, kind: input, shape index: {}]
  %s7 = inlined_call_operand.vmem [shape: bf16[8,128], index: 7, kind: output, shape index: {}]
  %s8 = sld [smem:[#allocation0]]
  $region46: #{actor_forward.1} parent=0
    _
  %s10 = ssub.s32 1, %s8
  %s11 = scalar_select 0, %s10, %s8
  $region1: #{actor_forward.1} parent=0
    #allocation2 [shape = 'u8[393216]{0}', space=vmem, size = 0x60000, scoped, tag = 'input window, operand 3, single buffered']
    #allocation3 [shape = 's32[1]{0}', space=sflag, size = 0x4, scoped, tag = 'scoped memory for actor_forward.1']
    #allocation4 [shape = 'u8[98304]{0}', space=vmem, size = 0x18000, scoped, tag = 'input window, operand 5, single buffered']
    #allocation5 [shape = 's32[1]{0}', space=sflag, size = 0x4, scoped, tag = 'scoped memory for actor_forward.1']
    %12 = vsyncpa [#allocation3], 0
    %13 = vsyncpa [#allocation5], 0
    // Predicated region
    $region2: #{actor_forward.1} parent=1 // pred_check
      _
    $region3: #{actor_forward.1} parent=1 // pred_check_branch
      %15 = sbr.rel (0) target = $region5
    $region4: #{actor_forward.1} parent=1 // pred_region
      _
    $region5: #{actor_forward.1} parent=1 // pred_fallthru
      _
    // Predicated region
    $region6: #{actor_forward.1} parent=1 // pred_check
      _
    $region7: #{actor_forward.1} parent=1 // pred_check_branch
      %17 = sbr.rel (0) target = $region9
    $region8: #{actor_forward.1} parent=1 // pred_region
      _
    $region9: #{actor_forward.1} parent=1 // pred_fallthru
      _
    // Predicated region
    $region10: #{actor_forward.1} parent=1 // pred_check
      _
    $region11: #{actor_forward.1} parent=1 // pred_check_branch
      %19 = sbr.rel (0) target = $region13
    $region12: #{actor_forward.1} parent=1 // pred_region
      _
    $region13: #{actor_forward.1} parent=1 // pred_fallthru
      _
    // Predicated region
    $region14: #{actor_forward.1} parent=1 // pred_check
      _
    $region15: #{actor_forward.1} parent=1 // pred_check_branch
      %21 = sbr.rel (0) target = $region17
    $region16: #{actor_forward.1} parent=1 // pred_region
      %s23 = ssub.s32 12288, 12288
      %24 = vsyncadd [#allocation3], %s23
      %s25 = sshll.u32 [#allocation2], 4
      %s26 = int_to_ptr.vmem [resolvable:$true] %s25
      %31 = dma.hbm_to_vmem [thread:$0]  %s3, 12288, %s26, [#allocation3], 192, 192, 12
    $region17: #{actor_forward.1} parent=1 // pred_fallthru
      _
    // Predicated region
    $region18: #{actor_forward.1} parent=1 // pred_check
      _
    $region19: #{actor_forward.1} parent=1 // pred_check_branch
      %33 = sbr.rel (0) target = $region21
    $region20: #{actor_forward.1} parent=1 // pred_region
      _
    $region21: #{actor_forward.1} parent=1 // pred_fallthru
      _
    // Predicated region
    $region22: #{actor_forward.1} parent=1 // pred_check
      _
    $region23: #{actor_forward.1} parent=1 // pred_check_branch
      %35 = sbr.rel (0) target = $region25
    $region24: #{actor_forward.1} parent=1 // pred_region
      %s37 = ssub.s32 3072, 3072
      %38 = vsyncadd [#allocation5], %s37
      %s39 = sshll.u32 [#allocation4], 4
      %s40 = int_to_ptr.vmem [resolvable:$true] %s39
      %45 = dma.hbm_to_vmem [thread:$0]  %s5, 3072, %s40, [#allocation5], 64, 64, 4
    $region25: #{actor_forward.1} parent=1 // pred_fallthru
      _
    // Predicated region
    $region26: #{actor_forward.1} parent=1 // pred_check
      _
    $region27: #{actor_forward.1} parent=1 // pred_check_branch
      %47 = sbr.rel (0) target = $region29
    $region28: #{actor_forward.1} parent=1 // pred_region
      _
    $region29: #{actor_forward.1} parent=1 // pred_fallthru
      _
    // Predicated region
    $region30: #{actor_forward.1} parent=1 // pred_check
      _
    $region31: #{actor_forward.1} parent=1 // pred_check_branch
      %49 = sbr.rel (0) target = $region33
    $region32: #{actor_forward.1} parent=1 // pred_region
      %50 = dma.done [#allocation3], 12288
    $region33: #{actor_forward.1} parent=1 // pred_fallthru
      _
    // Predicated region
    $region34: #{actor_forward.1} parent=1 // pred_check
      _
    $region35: #{actor_forward.1} parent=1 // pred_check_branch
      %52 = sbr.rel (0) target = $region37
    $region36: #{actor_forward.1} parent=1 // pred_region
      %53 = dma.done [#allocation5], 3072
    $region37: #{actor_forward.1} parent=1 // pred_fallthru
      _
    %v55 = vld [vmem:[%s0] sm:$0xf]
    %v56 = vld [vmem:[%s1] sm:$0xff]
    %v57 = vld [vmem:[%s2] sm:$0xf]
    %v59 = vlaneseq
    %v60 = vshrl.u32 %v59, 7
    %v61 = vsub.s32 0, %v60
    %v62 = vrot.slane %v57, %v61
    %v63 = vlaneseq
    %v64 = vshrl.u32 %v63, 7
    %v65 = vsub.s32 1, %v64
    %v66 = vrot.slane %v57, %v65
    %v67 = vlaneseq
    %v68 = vshrl.u32 %v67, 7
    %v69 = vsub.s32 2, %v68
    %v70 = vrot.slane %v57, %v69
    %v71 = vlaneseq
    %v72 = vshrl.u32 %v71, 7
    %v73 = vsub.s32 3, %v72
    %v74 = vrot.slane %v57, %v73
    %v80 = vcombine.high %v56, %v56
    %v82 = vunpack.c.l.s4 1983009808
    %v83 = vunpack.c.0.s8 %v82
    %v84 = vlaneseq
    %v85 = vshrl.u32 %v84, 7
    %v86 = vsub.s32 %v83, %v85
    %v87 = vrot.slane %v56, %v86
    %v89 = vunpack.c.l.s4 1983009808
    %v90 = vunpack.c.0.s8 %v89
    %v91 = vlaneseq
    %v92 = vshrl.u32 %v91, 7
    %v93 = vsub.s32 %v90, %v92
    %v94 = vrot.slane %v80, %v93
    %v95 = vcombine.high %v87, %v87
    %v96 = vcombine.high %v94, %v94
    %vm97 = vcmask 31744
    %v99 = vsel %vm97, %v55, 0
    %vm101 = vcmask 1041408
    %v103 = vsel %vm101, %v87, 0
    %v106 = vsel %vm101, %v95, 0
    %v109 = vsel %vm101, %v94, 0
    %v112 = vsel %vm101, %v96, 0
    %114 = vmatprep.subr.bf16.mxu0 %v106
    %115 = vmatpush1.bf16.msra.mxu0 %v103
    %116 = vmatprep.subr.bf16.mxu0 0
    %117 = vmatpush1.bf16.msra.mxu0 0
    %118 = vmatprep.subr.bf16.mxu0 0
    %119 = vmatpush1.bf16.msra.mxu0 0
    %120 = vmatprep.subr.bf16.mxu0 0
    %121 = vmatpush1.bf16.msra.mxu0 0
    %122 = vmatprep.subr.bf16.mxu0 0
    %123 = vmatpush1.bf16.msra.mxu0 0
    %124 = vmatprep.subr.bf16.mxu0 0
    %125 = vmatpush1.bf16.msra.mxu0 0
    %126 = vmatprep.subr.bf16.mxu0 0
    %127 = vmatpush1.bf16.msra.mxu0 0
    %128 = vmatprep.subr.bf16.mxu0 0
    %129 = vmatpush1.bf16.msra.mxu0 0
    %130 = vmatprep.subr.bf16.mxu0 0
    %131 = vmatpush1.bf16.msra.mxu0 0
    %132 = vmatprep.subr.bf16.mxu0 0
    %133 = vmatpush1.bf16.msra.mxu0 0
    %134 = vmatprep.subr.bf16.mxu0 0
    %135 = vmatpush1.bf16.msra.mxu0 0
    %136 = vmatprep.subr.bf16.mxu0 0
    %137 = vmatpush1.bf16.msra.mxu0 0
    %138 = vmatprep.subr.bf16.mxu0 0
    %139 = vmatpush1.bf16.msra.mxu0 0
    %140 = vmatprep.subr.bf16.mxu0 0
    %141 = vmatpush1.bf16.msra.mxu0 0
    %142 = vmatprep.subr.bf16.mxu0 0
    %143 = vmatpush1.bf16.msra.mxu0 0
    %144 = vmatprep.subr.bf16.mxu0 0
    %145 = vmatpush1.bf16.msra.mxu0 0
    %146 = vmatprep.mubr.bf16.mxu0 0
    %147 = vmatmul.mubr.bf16.gmra.mrb[0].mxu0 %v99
    %v148 = vpop.f32.mrb[0].mxu0
    %v149 = vadd.f32 %v62, %v148
    %v150 = vpop.f32.mrb[0].mxu0
    %v151 = vadd.f32 %v66, %v150
    %v152 = vpop.f32.mrb[0].mxu0
    %v153 = vpop.f32.mrb[0].mxu0
    %154 = vdwg.mxu0
    %155 = vmatprep.subr.bf16.mxu0 %v112
    %156 = vmatpush1.bf16.msra.mxu0 %v109
    %157 = vmatprep.subr.bf16.mxu0 0
    %158 = vmatpush1.bf16.msra.mxu0 0
    %159 = vmatprep.subr.bf16.mxu0 0
    %160 = vmatpush1.bf16.msra.mxu0 0
    %161 = vmatprep.subr.bf16.mxu0 0
    %162 = vmatpush1.bf16.msra.mxu0 0
    %163 = vmatprep.subr.bf16.mxu0 0
    %164 = vmatpush1.bf16.msra.mxu0 0
    %165 = vmatprep.subr.bf16.mxu0 0
    %166 = vmatpush1.bf16.msra.mxu0 0
    %167 = vmatprep.subr.bf16.mxu0 0
    %168 = vmatpush1.bf16.msra.mxu0 0
    %169 = vmatprep.subr.bf16.mxu0 0
    %170 = vmatpush1.bf16.msra.mxu0 0
    %171 = vmatprep.subr.bf16.mxu0 0
    %172 = vmatpush1.bf16.msra.mxu0 0
    %173 = vmatprep.subr.bf16.mxu0 0
    %174 = vmatpush1.bf16.msra.mxu0 0
    %175 = vmatprep.subr.bf16.mxu0 0
    %176 = vmatpush1.bf16.msra.mxu0 0
    %177 = vmatprep.subr.bf16.mxu0 0
    %178 = vmatpush1.bf16.msra.mxu0 0
    %179 = vmatprep.subr.bf16.mxu0 0
    %180 = vmatpush1.bf16.msra.mxu0 0
    %181 = vmatprep.subr.bf16.mxu0 0
    %182 = vmatpush1.bf16.msra.mxu0 0
    %183 = vmatprep.subr.bf16.mxu0 0
    %184 = vmatpush1.bf16.msra.mxu0 0
    %185 = vmatprep.subr.bf16.mxu0 0
    %186 = vmatpush1.bf16.msra.mxu0 0
    %187 = vmatprep.mubr.bf16.mxu0 0
    %188 = vmatmul.mubr.bf16.gmra.mrb[0].mxu0 %v99
    %v189 = vpop.f32.mrb[0].mxu0
    %v190 = vadd.f32 %v70, %v189
    %v191 = vpop.f32.mrb[0].mxu0
    %v192 = vadd.f32 %v74, %v191
    %v193 = vpop.f32.mrb[0].mxu0
    %v194 = vpop.f32.mrb[0].mxu0
    %195 = vdwg.mxu0
    %v196 = vmax.f32 %v149, 0.0
    %v197 = vmax.f32 %v151, 0.0
    %v198 = vmax.f32 %v190, 0.0
    %v199 = vmax.f32 %v192, 0.0
    %v200 = vpack.c.bf16 %v196, %v196
    %v201 = vpack.c.bf16 %v197, %v197
    %v202 = vpack.c.bf16 %v198, %v198
    %v203 = vpack.c.bf16 %v199, %v199
    %v204 = vld [vmem:[#allocation2] sm:$0xff]
    %v205 = vld [vmem:[#allocation2 + $0x8] sm:$0xf]
    %v206 = vld [vmem:[#allocation2 + $0xc] sm:$0xff]
    %v207 = vld [vmem:[#allocation2 + $0x14] sm:$0xf]
    %v208 = vld [vmem:[#allocation2 + $0x18] sm:$0xff]
    %v209 = vld [vmem:[#allocation2 + $0x20] sm:$0xf]
    %v210 = vld [vmem:[#allocation2 + $0x24] sm:$0xff]
    %v211 = vld [vmem:[#allocation2 + $0x2c] sm:$0xf]
    %v212 = vld [vmem:[#allocation2 + $0x30] sm:$0xff]
    %v213 = vld [vmem:[#allocation2 + $0x38] sm:$0xf]
    %v214 = vld [vmem:[#allocation2 + $0x3c] sm:$0xff]
    %v215 = vld [vmem:[#allocation2 + $0x44] sm:$0xf]
    %v216 = vld [vmem:[#allocation2 + $0x48] sm:$0xff]
    %v217 = vld [vmem:[#allocation2 + $0x50] sm:$0xf]
    %v218 = vld [vmem:[#allocation2 + $0x54] sm:$0xff]
    %v219 = vld [vmem:[#allocation2 + $0x5c] sm:$0xf]
    %v220 = vld [vmem:[#allocation2 + $0x60] sm:$0xff]
    %v221 = vld [vmem:[#allocation2 + $0x68] sm:$0xf]
    %v222 = vld [vmem:[#allocation2 + $0x6c] sm:$0xff]
    %v223 = vld [vmem:[#allocation2 + $0x74] sm:$0xf]
    %v224 = vld [vmem:[#allocation2 + $0x78] sm:$0xff]
    %v225 = vld [vmem:[#allocation2 + $0x80] sm:$0xf]
    %v226 = vld [vmem:[#allocation2 + $0x84] sm:$0xff]
    %v227 = vld [vmem:[#allocation2 + $0x8c] sm:$0xf]
    %v228 = vld [vmem:[#allocation2 + $0x90] sm:$0xff]
    %v229 = vld [vmem:[#allocation2 + $0x98] sm:$0xf]
    %v230 = vld [vmem:[#allocation2 + $0x9c] sm:$0xff]
    %v231 = vld [vmem:[#allocation2 + $0xa4] sm:$0xf]
    %v232 = vld [vmem:[#allocation2 + $0xa8] sm:$0xff]
    %v233 = vld [vmem:[#allocation2 + $0xb0] sm:$0xf]
    %v234 = vld [vmem:[#allocation2 + $0xb4] sm:$0xff]
    %v235 = vld [vmem:[#allocation2 + $0xbc] sm:$0xf]
    %v236 = vld [vmem:[#allocation2 + $0xc0] sm:$0xff]
    %v237 = vld [vmem:[#allocation2 + $0xc8] sm:$0xf]
    %v238 = vld [vmem:[#allocation2 + $0xcc] sm:$0xff]
    %v239 = vld [vmem:[#allocation2 + $0xd4] sm:$0xf]
    %v240 = vld [vmem:[#allocation2 + $0xd8] sm:$0xff]
    %v241 = vld [vmem:[#allocation2 + $0xe0] sm:$0xf]
    %v242 = vld [vmem:[#allocation2 + $0xe4] sm:$0xff]
    %v243 = vld [vmem:[#allocation2 + $0xec] sm:$0xf]
    %v244 = vld [vmem:[#allocation2 + $0xf0] sm:$0xff]
    %v245 = vld [vmem:[#allocation2 + $0xf8] sm:$0xf]
    %v246 = vld [vmem:[#allocation2 + $0xfc] sm:$0xff]
    %v247 = vld [vmem:[#allocation2 + $0x104] sm:$0xf]
    %v248 = vld [vmem:[#allocation2 + $0x108] sm:$0xff]
    %v249 = vld [vmem:[#allocation2 + $0x110] sm:$0xf]
    %v250 = vld [vmem:[#allocation2 + $0x114] sm:$0xff]
    %v251 = vld [vmem:[#allocation2 + $0x11c] sm:$0xf]
    %v252 = vld [vmem:[#allocation2 + $0x120] sm:$0xff]
    %v253 = vld [vmem:[#allocation2 + $0x128] sm:$0xf]
    %v254 = vld [vmem:[#allocation2 + $0x12c] sm:$0xff]
    %v255 = vld [vmem:[#allocation2 + $0x134] sm:$0xf]
    %v256 = vld [vmem:[#allocation2 + $0x138] sm:$0xff]
    %v257 = vld [vmem:[#allocation2 + $0x140] sm:$0xf]
    %v258 = vld [vmem:[#allocation2 + $0x144] sm:$0xff]
    %v259 = vld [vmem:[#allocation2 + $0x14c] sm:$0xf]
    %v260 = vld [vmem:[#allocation2 + $0x150] sm:$0xff]
    %v261 = vld [vmem:[#allocation2 + $0x158] sm:$0xf]
    %v262 = vld [vmem:[#allocation2 + $0x15c] sm:$0xff]
    %v263 = vld [vmem:[#allocation2 + $0x164] sm:$0xf]
    %v264 = vld [vmem:[#allocation2 + $0x168] sm:$0xff]
    %v265 = vld [vmem:[#allocation2 + $0x170] sm:$0xf]
    %v266 = vld [vmem:[#allocation2 + $0x174] sm:$0xff]
    %v267 = vld [vmem:[#allocation2 + $0x17c] sm:$0xf]
    %v268 = vld [vmem:[#allocation2 + $0x180] sm:$0xff]
    %v269 = vld [vmem:[#allocation2 + $0x188] sm:$0xf]
    %v270 = vld [vmem:[#allocation2 + $0x18c] sm:$0xff]
    %v271 = vld [vmem:[#allocation2 + $0x194] sm:$0xf]
    %v272 = vld [vmem:[#allocation2 + $0x198] sm:$0xff]
    %v273 = vld [vmem:[#allocation2 + $0x1a0] sm:$0xf]
    %v274 = vld [vmem:[#allocation2 + $0x1a4] sm:$0xff]
    %v275 = vld [vmem:[#allocation2 + $0x1ac] sm:$0xf]
    %v276 = vld [vmem:[#allocation2 + $0x1b0] sm:$0xff]
    %v277 = vld [vmem:[#allocation2 + $0x1b8] sm:$0xf]
    %v278 = vld [vmem:[#allocation2 + $0x1bc] sm:$0xff]
    %v279 = vld [vmem:[#allocation2 + $0x1c4] sm:$0xf]
    %v280 = vld [vmem:[#allocation2 + $0x1c8] sm:$0xff]
    %v281 = vld [vmem:[#allocation2 + $0x1d0] sm:$0xf]
    %v282 = vld [vmem:[#allocation2 + $0x1d4] sm:$0xff]
    %v283 = vld [vmem:[#allocation2 + $0x1dc] sm:$0xf]
    %v284 = vld [vmem:[#allocation2 + $0x1e0] sm:$0xff]
    %v285 = vld [vmem:[#allocation2 + $0x1e8] sm:$0xf]
    %v286 = vld [vmem:[#allocation2 + $0x1ec] sm:$0xff]
    %v287 = vld [vmem:[#allocation2 + $0x1f4] sm:$0xf]
    %v288 = vld [vmem:[#allocation2 + $0x1f8] sm:$0xff]
    %v289 = vld [vmem:[#allocation2 + $0x200] sm:$0xf]
    %v290 = vld [vmem:[#allocation2 + $0x204] sm:$0xff]
    %v291 = vld [vmem:[#allocation2 + $0x20c] sm:$0xf]
    %v292 = vld [vmem:[#allocation2 + $0x210] sm:$0xff]
    %v293 = vld [vmem:[#allocation2 + $0x218] sm:$0xf]
    %v294 = vld [vmem:[#allocation2 + $0x21c] sm:$0xff]
    %v295 = vld [vmem:[#allocation2 + $0x224] sm:$0xf]
    %v296 = vld [vmem:[#allocation2 + $0x228] sm:$0xff]
    %v297 = vld [vmem:[#allocation2 + $0x230] sm:$0xf]
    %v298 = vld [vmem:[#allocation2 + $0x234] sm:$0xff]
    %v299 = vld [vmem:[#allocation2 + $0x23c] sm:$0xf]
    %v300 = vld [vmem:[#allocation2 + $0x240] sm:$0xff]
    %v301 = vld [vmem:[#allocation2 + $0x248] sm:$0xf]
    %v302 = vld [vmem:[#allocation2 + $0x24c] sm:$0xff]
    %v303 = vld [vmem:[#allocation2 + $0x254] sm:$0xf]
    %v304 = vld [vmem:[#allocation2 + $0x258] sm:$0xff]
    %v305 = vld [vmem:[#allocation2 + $0x260] sm:$0xf]
    %v306 = vld [vmem:[#allocation2 + $0x264] sm:$0xff]
    %v307 = vld [vmem:[#allocation2 + $0x26c] sm:$0xf]
    %v308 = vld [vmem:[#allocation2 + $0x270] sm:$0xff]
    %v309 = vld [vmem:[#allocation2 + $0x278] sm:$0xf]
    %v310 = vld [vmem:[#allocation2 + $0x27c] sm:$0xff]
    %v311 = vld [vmem:[#allocation2 + $0x284] sm:$0xf]
    %v312 = vld [vmem:[#allocation2 + $0x288] sm:$0xff]
    %v313 = vld [vmem:[#allocation2 + $0x290] sm:$0xf]
    %v314 = vld [vmem:[#allocation2 + $0x294] sm:$0xff]
    %v315 = vld [vmem:[#allocation2 + $0x29c] sm:$0xf]
    %v316 = vld [vmem:[#allocation2 + $0x2a0] sm:$0xff]
    %v317 = vld [vmem:[#allocation2 + $0x2a8] sm:$0xf]
    %v318 = vld [vmem:[#allocation2 + $0x2ac] sm:$0xff]
    %v319 = vld [vmem:[#allocation2 + $0x2b4] sm:$0xf]
    %v320 = vld [vmem:[#allocation2 + $0x2b8] sm:$0xff]
    %v321 = vld [vmem:[#allocation2 + $0x2c0] sm:$0xf]
    %v322 = vld [vmem:[#allocation2 + $0x2c4] sm:$0xff]
    %v323 = vld [vmem:[#allocation2 + $0x2cc] sm:$0xf]
    %v324 = vld [vmem:[#allocation2 + $0x2d0] sm:$0xff]
    %v325 = vld [vmem:[#allocation2 + $0x2d8] sm:$0xf]
    %v326 = vld [vmem:[#allocation2 + $0x2dc] sm:$0xff]
    %v327 = vld [vmem:[#allocation2 + $0x2e4] sm:$0xf]
    %v328 = vld [vmem:[#allocation2 + $0x2e8] sm:$0xff]
    %v329 = vld [vmem:[#allocation2 + $0x2f0] sm:$0xf]
    %v330 = vld [vmem:[#allocation2 + $0x2f4] sm:$0xff]
    %v331 = vld [vmem:[#allocation2 + $0x2fc] sm:$0xf]
    %v332 = vld [vmem:[%s4] sm:$0x7]
    %v334 = vlaneseq
    %v335 = vshrl.u32 %v334, 7
    %v336 = vsub.s32 0, %v335
    %v337 = vrot.slane %v332, %v336
    %v338 = vlaneseq
    %v339 = vshrl.u32 %v338, 7
    %v340 = vsub.s32 1, %v339
    %v341 = vrot.slane %v332, %v340
    %v342 = vlaneseq
    %v343 = vshrl.u32 %v342, 7
    %v344 = vsub.s32 2, %v343
    %v345 = vrot.slane %v332, %v344
    %v477 = vunpack.c.l.b16 %v204
    %v478 = vunpack.c.h.b16 %v204
    %v479 = vunpack.c.l.b16 %v205
    %v480 = vunpack.c.l.b16 %v206
    %v481 = vunpack.c.h.b16 %v206
    %v482 = vunpack.c.l.b16 %v207
    %v483 = vunpack.c.l.b16 %v208
    %v484 = vunpack.c.h.b16 %v208
    %v485 = vunpack.c.l.b16 %v209
    %v486 = vunpack.c.l.b16 %v210
    %v487 = vunpack.c.h.b16 %v210
    %v488 = vunpack.c.l.b16 %v211
    %v489 = vunpack.c.l.b16 %v212
    %v490 = vunpack.c.h.b16 %v212
    %v491 = vunpack.c.l.b16 %v213
    %v492 = vunpack.c.l.b16 %v214
    %v493 = vunpack.c.h.b16 %v214
    %v494 = vunpack.c.l.b16 %v215
    %v495 = vunpack.c.l.b16 %v216
    %v496 = vunpack.c.h.b16 %v216
    %v497 = vunpack.c.l.b16 %v217
    %v498 = vunpack.c.l.b16 %v218
    %v499 = vunpack.c.h.b16 %v218
    %v500 = vunpack.c.l.b16 %v219
    %v501 = vunpack.c.l.b16 %v220
    %v502 = vunpack.c.h.b16 %v220
    %v503 = vunpack.c.l.b16 %v221
    %v504 = vunpack.c.l.b16 %v222
    %v505 = vunpack.c.h.b16 %v222
    %v506 = vunpack.c.l.b16 %v223
    %v507 = vunpack.c.l.b16 %v224
    %v508 = vunpack.c.h.b16 %v224
    %v509 = vunpack.c.l.b16 %v225
    %v510 = vunpack.c.l.b16 %v226
    %v511 = vunpack.c.h.b16 %v226
    %v512 = vunpack.c.l.b16 %v227
    %v513 = vunpack.c.l.b16 %v228
    %v514 = vunpack.c.h.b16 %v228
    %v515 = vunpack.c.l.b16 %v229
    %v516 = vunpack.c.l.b16 %v230
    %v517 = vunpack.c.h.b16 %v230
    %v518 = vunpack.c.l.b16 %v231
    %v519 = vunpack.c.l.b16 %v232
    %v520 = vunpack.c.h.b16 %v232
    %v521 = vunpack.c.l.b16 %v233
    %v522 = vunpack.c.l.b16 %v234
    %v523 = vunpack.c.h.b16 %v234
    %v524 = vunpack.c.l.b16 %v235
    %v525 = vunpack.c.l.b16 %v236
    %v526 = vunpack.c.h.b16 %v236
    %v527 = vunpack.c.l.b16 %v237
    %v528 = vunpack.c.l.b16 %v238
    %v529 = vunpack.c.h.b16 %v238
    %v530 = vunpack.c.l.b16 %v239
    %v531 = vunpack.c.l.b16 %v240
    %v532 = vunpack.c.h.b16 %v240
    %v533 = vunpack.c.l.b16 %v241
    %v534 = vunpack.c.l.b16 %v242
    %v535 = vunpack.c.h.b16 %v242
    %v536 = vunpack.c.l.b16 %v243
    %v537 = vunpack.c.l.b16 %v244
    %v538 = vunpack.c.h.b16 %v244
    %v539 = vunpack.c.l.b16 %v245
    %v540 = vunpack.c.l.b16 %v246
    %v541 = vunpack.c.h.b16 %v246
    %v542 = vunpack.c.l.b16 %v247
    %v543 = vunpack.c.l.b16 %v248
    %v544 = vunpack.c.h.b16 %v248
    %v545 = vunpack.c.l.b16 %v249
    %v546 = vunpack.c.l.b16 %v250
    %v547 = vunpack.c.h.b16 %v250
    %v548 = vunpack.c.l.b16 %v251
    %v549 = vunpack.c.l.b16 %v252
    %v550 = vunpack.c.h.b16 %v252
    %v551 = vunpack.c.l.b16 %v253
    %v552 = vunpack.c.l.b16 %v254
    %v553 = vunpack.c.h.b16 %v254
    %v554 = vunpack.c.l.b16 %v255
    %v555 = vunpack.c.l.b16 %v256
    %v556 = vunpack.c.h.b16 %v256
    %v557 = vunpack.c.l.b16 %v257
    %v558 = vunpack.c.l.b16 %v258
    %v559 = vunpack.c.h.b16 %v258
    %v560 = vunpack.c.l.b16 %v259
    %v561 = vunpack.c.l.b16 %v260
    %v562 = vunpack.c.h.b16 %v260
    %v563 = vunpack.c.l.b16 %v261
    %v564 = vunpack.c.l.b16 %v262
    %v565 = vunpack.c.h.b16 %v262
    %v566 = vunpack.c.l.b16 %v263
    %v567 = vunpack.c.l.b16 %v264
    %v568 = vunpack.c.h.b16 %v264
    %v569 = vunpack.c.l.b16 %v265
    %v570 = vunpack.c.l.b16 %v266
    %v571 = vunpack.c.h.b16 %v266
    %v572 = vunpack.c.l.b16 %v267
    %v573 = vunpack.c.l.b16 %v268
    %v574 = vunpack.c.h.b16 %v268
    %v575 = vunpack.c.l.b16 %v269
    %v576 = vunpack.c.l.b16 %v270
    %v577 = vunpack.c.h.b16 %v270
    %v578 = vunpack.c.l.b16 %v271
    %v579 = vunpack.c.l.b16 %v272
    %v580 = vunpack.c.h.b16 %v272
    %v581 = vunpack.c.l.b16 %v273
    %v582 = vunpack.c.l.b16 %v274
    %v583 = vunpack.c.h.b16 %v274
    %v584 = vunpack.c.l.b16 %v275
    %v585 = vunpack.c.l.b16 %v276
    %v586 = vunpack.c.h.b16 %v276
    %v587 = vunpack.c.l.b16 %v277
    %v588 = vunpack.c.l.b16 %v278
    %v589 = vunpack.c.h.b16 %v278
    %v590 = vunpack.c.l.b16 %v279
    %v591 = vunpack.c.l.b16 %v280
    %v592 = vunpack.c.h.b16 %v280
    %v593 = vunpack.c.l.b16 %v281
    %v594 = vunpack.c.l.b16 %v282
    %v595 = vunpack.c.h.b16 %v282
    %v596 = vunpack.c.l.b16 %v283
    %v597 = vunpack.c.l.b16 %v284
    %v598 = vunpack.c.h.b16 %v284
    %v599 = vunpack.c.l.b16 %v285
    %v600 = vunpack.c.l.b16 %v286
    %v601 = vunpack.c.h.b16 %v286
    %v602 = vunpack.c.l.b16 %v287
    %v603 = vunpack.c.l.b16 %v288
    %v604 = vunpack.c.h.b16 %v288
    %v605 = vunpack.c.l.b16 %v289
    %v606 = vunpack.c.l.b16 %v290
    %v607 = vunpack.c.h.b16 %v290
    %v608 = vunpack.c.l.b16 %v291
    %v609 = vunpack.c.l.b16 %v292
    %v610 = vunpack.c.h.b16 %v292
    %v611 = vunpack.c.l.b16 %v293
    %v612 = vunpack.c.l.b16 %v294
    %v613 = vunpack.c.h.b16 %v294
    %v614 = vunpack.c.l.b16 %v295
    %v615 = vunpack.c.l.b16 %v296
    %v616 = vunpack.c.h.b16 %v296
    %v617 = vunpack.c.l.b16 %v297
    %v618 = vunpack.c.l.b16 %v298
    %v619 = vunpack.c.h.b16 %v298
    %v620 = vunpack.c.l.b16 %v299
    %v621 = vunpack.c.l.b16 %v300
    %v622 = vunpack.c.h.b16 %v300
    %v623 = vunpack.c.l.b16 %v301
    %v624 = vunpack.c.l.b16 %v302
    %v625 = vunpack.c.h.b16 %v302
    %v626 = vunpack.c.l.b16 %v303
    %v627 = vunpack.c.l.b16 %v304
    %v628 = vunpack.c.h.b16 %v304
    %v629 = vunpack.c.l.b16 %v305
    %v630 = vunpack.c.l.b16 %v306
    %v631 = vunpack.c.h.b16 %v306
    %v632 = vunpack.c.l.b16 %v307
    %v633 = vunpack.c.l.b16 %v308
    %v634 = vunpack.c.h.b16 %v308
    %v635 = vunpack.c.l.b16 %v309
    %v636 = vunpack.c.l.b16 %v310
    %v637 = vunpack.c.h.b16 %v310
    %v638 = vunpack.c.l.b16 %v311
    %v639 = vunpack.c.l.b16 %v312
    %v640 = vunpack.c.h.b16 %v312
    %v641 = vunpack.c.l.b16 %v313
    %v642 = vunpack.c.l.b16 %v314
    %v643 = vunpack.c.h.b16 %v314
    %v644 = vunpack.c.l.b16 %v315
    %v645 = vunpack.c.l.b16 %v316
    %v646 = vunpack.c.h.b16 %v316
    %v647 = vunpack.c.l.b16 %v317
    %v648 = vunpack.c.l.b16 %v318
    %v649 = vunpack.c.h.b16 %v318
    %v650 = vunpack.c.l.b16 %v319
    %v651 = vunpack.c.l.b16 %v320
    %v652 = vunpack.c.h.b16 %v320
    %v653 = vunpack.c.l.b16 %v321
    %v654 = vunpack.c.l.b16 %v322
    %v655 = vunpack.c.h.b16 %v322
    %v656 = vunpack.c.l.b16 %v323
    %v657 = vunpack.c.l.b16 %v324
    %v658 = vunpack.c.h.b16 %v324
    %v659 = vunpack.c.l.b16 %v325
    %v660 = vunpack.c.l.b16 %v326
    %v661 = vunpack.c.h.b16 %v326
    %v662 = vunpack.c.l.b16 %v327
    %v663 = vunpack.c.l.b16 %v328
    %v664 = vunpack.c.h.b16 %v328
    %v665 = vunpack.c.l.b16 %v329
    %v666 = vunpack.c.l.b16 %v330
    %v667 = vunpack.c.h.b16 %v330
    %v668 = vunpack.c.l.b16 %v331
    %v669 = vpack.c.b16 %v480, %v477
    %v670 = vpack.c.b16 %v481, %v478
    %v671 = vpack.c.b16 %v482, %v479
    %v672 = vpack.c.b16 %v486, %v483
    %v673 = vpack.c.b16 %v487, %v484
    %v674 = vpack.c.b16 %v488, %v485
    %v675 = vpack.c.b16 %v492, %v489
    %v676 = vpack.c.b16 %v493, %v490
    %v677 = vpack.c.b16 %v494, %v491
    %v678 = vpack.c.b16 %v498, %v495
    %v679 = vpack.c.b16 %v499, %v496
    %v680 = vpack.c.b16 %v500, %v497
    %v681 = vpack.c.b16 %v504, %v501
    %v682 = vpack.c.b16 %v505, %v502
    %v683 = vpack.c.b16 %v506, %v503
    %v684 = vpack.c.b16 %v510, %v507
    %v685 = vpack.c.b16 %v511, %v508
    %v686 = vpack.c.b16 %v512, %v509
    %v687 = vpack.c.b16 %v516, %v513
    %v688 = vpack.c.b16 %v517, %v514
    %v689 = vpack.c.b16 %v518, %v515
    %v690 = vpack.c.b16 %v522, %v519
    %v691 = vpack.c.b16 %v523, %v520
    %v692 = vpack.c.b16 %v524, %v521
    %v693 = vpack.c.b16 %v528, %v525
    %v694 = vpack.c.b16 %v529, %v526
    %v695 = vpack.c.b16 %v530, %v527
    %v696 = vpack.c.b16 %v534, %v531
    %v697 = vpack.c.b16 %v535, %v532
    %v698 = vpack.c.b16 %v536, %v533
    %v699 = vpack.c.b16 %v540, %v537
    %v700 = vpack.c.b16 %v541, %v538
    %v701 = vpack.c.b16 %v542, %v539
    %v702 = vpack.c.b16 %v546, %v543
    %v703 = vpack.c.b16 %v547, %v544
    %v704 = vpack.c.b16 %v548, %v545
    %v705 = vpack.c.b16 %v552, %v549
    %v706 = vpack.c.b16 %v553, %v550
    %v707 = vpack.c.b16 %v554, %v551
    %v708 = vpack.c.b16 %v558, %v555
    %v709 = vpack.c.b16 %v559, %v556
    %v710 = vpack.c.b16 %v560, %v557
    %v711 = vpack.c.b16 %v564, %v561
    %v712 = vpack.c.b16 %v565, %v562
    %v713 = vpack.c.b16 %v566, %v563
    %v714 = vpack.c.b16 %v570, %v567
    %v715 = vpack.c.b16 %v571, %v568
    %v716 = vpack.c.b16 %v572, %v569
    %v717 = vpack.c.b16 %v576, %v573
    %v718 = vpack.c.b16 %v577, %v574
    %v719 = vpack.c.b16 %v578, %v575
    %v720 = vpack.c.b16 %v582, %v579
    %v721 = vpack.c.b16 %v583, %v580
    %v722 = vpack.c.b16 %v584, %v581
    %v723 = vpack.c.b16 %v588, %v585
    %v724 = vpack.c.b16 %v589, %v586
    %v725 = vpack.c.b16 %v590, %v587
    %v726 = vpack.c.b16 %v594, %v591
    %v727 = vpack.c.b16 %v595, %v592
    %v728 = vpack.c.b16 %v596, %v593
    %v729 = vpack.c.b16 %v600, %v597
    %v730 = vpack.c.b16 %v601, %v598
    %v731 = vpack.c.b16 %v602, %v599
    %v732 = vpack.c.b16 %v606, %v603
    %v733 = vpack.c.b16 %v607, %v604
    %v734 = vpack.c.b16 %v608, %v605
    %v735 = vpack.c.b16 %v612, %v609
    %v736 = vpack.c.b16 %v613, %v610
    %v737 = vpack.c.b16 %v614, %v611
    %v738 = vpack.c.b16 %v618, %v615
    %v739 = vpack.c.b16 %v619, %v616
    %v740 = vpack.c.b16 %v620, %v617
    %v741 = vpack.c.b16 %v624, %v621
    %v742 = vpack.c.b16 %v625, %v622
    %v743 = vpack.c.b16 %v626, %v623
    %v744 = vpack.c.b16 %v630, %v627
    %v745 = vpack.c.b16 %v631, %v628
    %v746 = vpack.c.b16 %v632, %v629
    %v747 = vpack.c.b16 %v636, %v633
    %v748 = vpack.c.b16 %v637, %v634
    %v749 = vpack.c.b16 %v638, %v635
    %v750 = vpack.c.b16 %v642, %v639
    %v751 = vpack.c.b16 %v643, %v640
    %v752 = vpack.c.b16 %v644, %v641
    %v753 = vpack.c.b16 %v648, %v645
    %v754 = vpack.c.b16 %v649, %v646
    %v755 = vpack.c.b16 %v650, %v647
    %v756 = vpack.c.b16 %v654, %v651
    %v757 = vpack.c.b16 %v655, %v652
    %v758 = vpack.c.b16 %v656, %v653
    %v759 = vpack.c.b16 %v660, %v657
    %v760 = vpack.c.b16 %v661, %v658
    %v761 = vpack.c.b16 %v662, %v659
    %v762 = vpack.c.b16 %v666, %v663
    %v763 = vpack.c.b16 %v667, %v664
    %v764 = vpack.c.b16 %v668, %v665
    %861 = vmatprep.subr.bf16.mxu0 %v670
    %862 = vmatpush1.bf16.msra.mxu0 %v669
    %863 = vmatprep.subr.bf16.mxu0 %v673
    %864 = vmatpush1.bf16.msra.mxu0 %v672
    %865 = vmatprep.subr.bf16.mxu0 %v676
    %866 = vmatpush1.bf16.msra.mxu0 %v675
    %867 = vmatprep.subr.bf16.mxu0 %v679
    %868 = vmatpush1.bf16.msra.mxu0 %v678
    %869 = vmatprep.subr.bf16.mxu0 %v682
    %870 = vmatpush1.bf16.msra.mxu0 %v681
    %871 = vmatprep.subr.bf16.mxu0 %v685
    %872 = vmatpush1.bf16.msra.mxu0 %v684
    %873 = vmatprep.subr.bf16.mxu0 %v688
    %874 = vmatpush1.bf16.msra.mxu0 %v687
    %875 = vmatprep.subr.bf16.mxu0 %v691
    %876 = vmatpush1.bf16.msra.mxu0 %v690
    %877 = vmatprep.subr.bf16.mxu0 %v694
    %878 = vmatpush1.bf16.msra.mxu0 %v693
    %879 = vmatprep.subr.bf16.mxu0 %v697
    %880 = vmatpush1.bf16.msra.mxu0 %v696
    %881 = vmatprep.subr.bf16.mxu0 %v700
    %882 = vmatpush1.bf16.msra.mxu0 %v699
    %883 = vmatprep.subr.bf16.mxu0 %v703
    %884 = vmatpush1.bf16.msra.mxu0 %v702
    %885 = vmatprep.subr.bf16.mxu0 %v706
    %886 = vmatpush1.bf16.msra.mxu0 %v705
    %887 = vmatprep.subr.bf16.mxu0 %v709
    %888 = vmatpush1.bf16.msra.mxu0 %v708
    %889 = vmatprep.subr.bf16.mxu0 %v712
    %890 = vmatpush1.bf16.msra.mxu0 %v711
    %891 = vmatprep.subr.bf16.mxu0 %v715
    %892 = vmatpush1.bf16.msra.mxu0 %v714
    %893 = vmatprep.mubr.bf16.mxu0 %v201
    %894 = vmatmul.mubr.bf16.gmra.mrb[0].mxu0 %v200
    %v895 = vpop.f32.mrb[0].mxu0
    %v896 = vadd.f32 %v337, %v895
    %v897 = vpop.f32.mrb[0].mxu0
    %v898 = vadd.f32 %v341, %v897
    %v899 = vpop.f32.mrb[0].mxu0
    %v900 = vpop.f32.mrb[0].mxu0
    %901 = vdwg.mxu0
    %902 = vmatprep.subr.bf16.mxu0 %v718
    %903 = vmatpush1.bf16.msra.mxu0 %v717
    %904 = vmatprep.subr.bf16.mxu0 %v721
    %905 = vmatpush1.bf16.msra.mxu0 %v720
    %906 = vmatprep.subr.bf16.mxu0 %v724
    %907 = vmatpush1.bf16.msra.mxu0 %v723
    %908 = vmatprep.subr.bf16.mxu0 %v727
    %909 = vmatpush1.bf16.msra.mxu0 %v726
    %910 = vmatprep.subr.bf16.mxu0 %v730
    %911 = vmatpush1.bf16.msra.mxu0 %v729
    %912 = vmatprep.subr.bf16.mxu0 %v733
    %913 = vmatpush1.bf16.msra.mxu0 %v732
    %914 = vmatprep.subr.bf16.mxu0 %v736
    %915 = vmatpush1.bf16.msra.mxu0 %v735
    %916 = vmatprep.subr.bf16.mxu0 %v739
    %917 = vmatpush1.bf16.msra.mxu0 %v738
    %918 = vmatprep.subr.bf16.mxu0 %v742
    %919 = vmatpush1.bf16.msra.mxu0 %v741
    %920 = vmatprep.subr.bf16.mxu0 %v745
    %921 = vmatpush1.bf16.msra.mxu0 %v744
    %922 = vmatprep.subr.bf16.mxu0 %v748
    %923 = vmatpush1.bf16.msra.mxu0 %v747
    %924 = vmatprep.subr.bf16.mxu0 %v751
    %925 = vmatpush1.bf16.msra.mxu0 %v750
    %926 = vmatprep.subr.bf16.mxu0 %v754
    %927 = vmatpush1.bf16.msra.mxu0 %v753
    %928 = vmatprep.subr.bf16.mxu0 %v757
    %929 = vmatpush1.bf16.msra.mxu0 %v756
    %930 = vmatprep.subr.bf16.mxu0 %v760
    %931 = vmatpush1.bf16.msra.mxu0 %v759
    %932 = vmatprep.subr.bf16.mxu0 %v763
    %933 = vmatpush1.bf16.msra.mxu0 %v762
    %934 = vmatprep.mubr.bf16.mxu0 %v203
    %935 = vmatmul.mubr.bf16.gmra.mrb[0].mxu0 %v202
    %v936 = vpop.f32.mrb[0].mxu0
    %v937 = vadd.f32 %v896, %v936
    %v938 = vpop.f32.mrb[0].mxu0
    %v939 = vadd.f32 %v898, %v938
    %v940 = vpop.f32.mrb[0].mxu0
    %v941 = vpop.f32.mrb[0].mxu0
    %942 = vdwg.mxu0
    %943 = vmatprep.subr.bf16.mxu0 0
    %944 = vmatpush1.bf16.msra.mxu0 %v671
    %945 = vmatprep.subr.bf16.mxu0 0
    %946 = vmatpush1.bf16.msra.mxu0 %v674
    %947 = vmatprep.subr.bf16.mxu0 0
    %948 = vmatpush1.bf16.msra.mxu0 %v677
    %949 = vmatprep.subr.bf16.mxu0 0
    %950 = vmatpush1.bf16.msra.mxu0 %v680
    %951 = vmatprep.subr.bf16.mxu0 0
    %952 = vmatpush1.bf16.msra.mxu0 %v683
    %953 = vmatprep.subr.bf16.mxu0 0
    %954 = vmatpush1.bf16.msra.mxu0 %v686
    %955 = vmatprep.subr.bf16.mxu0 0
    %956 = vmatpush1.bf16.msra.mxu0 %v689
    %957 = vmatprep.subr.bf16.mxu0 0
    %958 = vmatpush1.bf16.msra.mxu0 %v692
    %959 = vmatprep.subr.bf16.mxu0 0
    %960 = vmatpush1.bf16.msra.mxu0 %v695
    %961 = vmatprep.subr.bf16.mxu0 0
    %962 = vmatpush1.bf16.msra.mxu0 %v698
    %963 = vmatprep.subr.bf16.mxu0 0
    %964 = vmatpush1.bf16.msra.mxu0 %v701
    %965 = vmatprep.subr.bf16.mxu0 0
    %966 = vmatpush1.bf16.msra.mxu0 %v704
    %967 = vmatprep.subr.bf16.mxu0 0
    %968 = vmatpush1.bf16.msra.mxu0 %v707
    %969 = vmatprep.subr.bf16.mxu0 0
    %970 = vmatpush1.bf16.msra.mxu0 %v710
    %971 = vmatprep.subr.bf16.mxu0 0
    %972 = vmatpush1.bf16.msra.mxu0 %v713
    %973 = vmatprep.subr.bf16.mxu0 0
    %974 = vmatpush1.bf16.msra.mxu0 %v716
    %975 = vmatprep.mubr.bf16.mxu0 %v201
    %976 = vmatmul.mubr.bf16.gmra.mrb[0].mxu0 %v200
    %v977 = vpop.f32.mrb[0].mxu0
    %v978 = vadd.f32 %v345, %v977
    %v979 = vpop.f32.mrb[0].mxu0
    %v980 = vpop.f32.mrb[0].mxu0
    %v981 = vpop.f32.mrb[0].mxu0
    %982 = vdwg.mxu0
    %983 = vmatprep.subr.bf16.mxu0 0
    %984 = vmatpush1.bf16.msra.mxu0 %v719
    %985 = vmatprep.subr.bf16.mxu0 0
    %986 = vmatpush1.bf16.msra.mxu0 %v722
    %987 = vmatprep.subr.bf16.mxu0 0
    %988 = vmatpush1.bf16.msra.mxu0 %v725
    %989 = vmatprep.subr.bf16.mxu0 0
    %990 = vmatpush1.bf16.msra.mxu0 %v728
    %991 = vmatprep.subr.bf16.mxu0 0
    %992 = vmatpush1.bf16.msra.mxu0 %v731
    %993 = vmatprep.subr.bf16.mxu0 0
    %994 = vmatpush1.bf16.msra.mxu0 %v734
    %995 = vmatprep.subr.bf16.mxu0 0
    %996 = vmatpush1.bf16.msra.mxu0 %v737
    %997 = vmatprep.subr.bf16.mxu0 0
    %998 = vmatpush1.bf16.msra.mxu0 %v740
    %999 = vmatprep.subr.bf16.mxu0 0
    %1000 = vmatpush1.bf16.msra.mxu0 %v743
    %1001 = vmatprep.subr.bf16.mxu0 0
    %1002 = vmatpush1.bf16.msra.mxu0 %v746
    %1003 = vmatprep.subr.bf16.mxu0 0
    %1004 = vmatpush1.bf16.msra.mxu0 %v749
    %1005 = vmatprep.subr.bf16.mxu0 0
    %1006 = vmatpush1.bf16.msra.mxu0 %v752
    %1007 = vmatprep.subr.bf16.mxu0 0
    %1008 = vmatpush1.bf16.msra.mxu0 %v755
    %1009 = vmatprep.subr.bf16.mxu0 0
    %1010 = vmatpush1.bf16.msra.mxu0 %v758
    %1011 = vmatprep.subr.bf16.mxu0 0
    %1012 = vmatpush1.bf16.msra.mxu0 %v761
    %1013 = vmatprep.subr.bf16.mxu0 0
    %1014 = vmatpush1.bf16.msra.mxu0 %v764
    %1015 = vmatprep.mubr.bf16.mxu0 %v203
    %1016 = vmatmul.mubr.bf16.gmra.mrb[0].mxu0 %v202
    %v1017 = vpop.f32.mrb[0].mxu0
    %v1018 = vadd.f32 %v978, %v1017
    %v1019 = vpop.f32.mrb[0].mxu0
    %v1020 = vpop.f32.mrb[0].mxu0
    %v1021 = vpop.f32.mrb[0].mxu0
    %1022 = vdwg.mxu0
    %v1023 = vmax.f32 %v937, 0.0
    %v1024 = vmax.f32 %v939, 0.0
    %v1025 = vmax.f32 %v1018, 0.0
    %v1026 = vpack.c.bf16 %v1023, %v1023
    %v1027 = vpack.c.bf16 %v1024, %v1024
    %v1028 = vpack.c.bf16 %v1025, %v1025
    %v1029 = vld [vmem:[#allocation4] sm:$0xf]
    %v1030 = vld [vmem:[#allocation4 + $0x4] sm:$0xf]
    %v1031 = vld [vmem:[#allocation4 + $0x8] sm:$0xf]
    %v1032 = vld [vmem:[#allocation4 + $0xc] sm:$0xf]
    %v1033 = vld [vmem:[#allocation4 + $0x10] sm:$0xf]
    %v1034 = vld [vmem:[#allocation4 + $0x14] sm:$0xf]
    %v1035 = vld [vmem:[#allocation4 + $0x18] sm:$0xf]
    %v1036 = vld [vmem:[#allocation4 + $0x1c] sm:$0xf]
    %v1037 = vld [vmem:[#allocation4 + $0x20] sm:$0xf]
    %v1038 = vld [vmem:[#allocation4 + $0x24] sm:$0xf]
    %v1039 = vld [vmem:[#allocation4 + $0x28] sm:$0xf]
    %v1040 = vld [vmem:[#allocation4 + $0x2c] sm:$0xf]
    %v1041 = vld [vmem:[#allocation4 + $0x30] sm:$0xf]
    %v1042 = vld [vmem:[#allocation4 + $0x34] sm:$0xf]
    %v1043 = vld [vmem:[#allocation4 + $0x38] sm:$0xf]
    %v1044 = vld [vmem:[#allocation4 + $0x3c] sm:$0xf]
    %v1045 = vld [vmem:[#allocation4 + $0x40] sm:$0xf]
    %v1046 = vld [vmem:[#allocation4 + $0x44] sm:$0xf]
    %v1047 = vld [vmem:[#allocation4 + $0x48] sm:$0xf]
    %v1048 = vld [vmem:[#allocation4 + $0x4c] sm:$0xf]
    %v1049 = vld [vmem:[#allocation4 + $0x50] sm:$0xf]
    %v1050 = vld [vmem:[#allocation4 + $0x54] sm:$0xf]
    %v1051 = vld [vmem:[#allocation4 + $0x58] sm:$0xf]
    %v1052 = vld [vmem:[#allocation4 + $0x5c] sm:$0xf]
    %v1053 = vld [vmem:[#allocation4 + $0x60] sm:$0xf]
    %v1054 = vld [vmem:[#allocation4 + $0x64] sm:$0xf]
    %v1055 = vld [vmem:[#allocation4 + $0x68] sm:$0xf]
    %v1056 = vld [vmem:[#allocation4 + $0x6c] sm:$0xf]
    %v1057 = vld [vmem:[#allocation4 + $0x70] sm:$0xf]
    %v1058 = vld [vmem:[#allocation4 + $0x74] sm:$0xf]
    %v1059 = vld [vmem:[#allocation4 + $0x78] sm:$0xf]
    %v1060 = vld [vmem:[#allocation4 + $0x7c] sm:$0xf]
    %v1061 = vld [vmem:[#allocation4 + $0x80] sm:$0xf]
    %v1062 = vld [vmem:[#allocation4 + $0x84] sm:$0xf]
    %v1063 = vld [vmem:[#allocation4 + $0x88] sm:$0xf]
    %v1064 = vld [vmem:[#allocation4 + $0x8c] sm:$0xf]
    %v1065 = vld [vmem:[#allocation4 + $0x90] sm:$0xf]
    %v1066 = vld [vmem:[#allocation4 + $0x94] sm:$0xf]
    %v1067 = vld [vmem:[#allocation4 + $0x98] sm:$0xf]
    %v1068 = vld [vmem:[#allocation4 + $0x9c] sm:$0xf]
    %v1069 = vld [vmem:[#allocation4 + $0xa0] sm:$0xf]
    %v1070 = vld [vmem:[#allocation4 + $0xa4] sm:$0xf]
    %v1071 = vld [vmem:[#allocation4 + $0xa8] sm:$0xf]
    %v1072 = vld [vmem:[#allocation4 + $0xac] sm:$0xf]
    %v1073 = vld [vmem:[#allocation4 + $0xb0] sm:$0xf]
    %v1074 = vld [vmem:[#allocation4 + $0xb4] sm:$0xf]
    %v1075 = vld [vmem:[#allocation4 + $0xb8] sm:$0xf]
    %v1076 = vld [vmem:[#allocation4 + $0xbc] sm:$0xf]
    %v1077 = vld [vmem:[%s6] sm:$0x1]
    %v1079 = vlaneseq
    %v1080 = vshrl.u32 %v1079, 7
    %v1081 = vsub.s32 0, %v1080
    %v1082 = vrot.slane %v1077, %v1081
    %v1132 = vunpack.c.l.b16 %v1029
    %v1133 = vunpack.c.l.b16 %v1030
    %v1134 = vunpack.c.l.b16 %v1031
    %v1135 = vunpack.c.l.b16 %v1032
    %v1136 = vunpack.c.l.b16 %v1033
    %v1137 = vunpack.c.l.b16 %v1034
    %v1138 = vunpack.c.l.b16 %v1035
    %v1139 = vunpack.c.l.b16 %v1036
    %v1140 = vunpack.c.l.b16 %v1037
    %v1141 = vunpack.c.l.b16 %v1038
    %v1142 = vunpack.c.l.b16 %v1039
    %v1143 = vunpack.c.l.b16 %v1040
    %v1144 = vunpack.c.l.b16 %v1041
    %v1145 = vunpack.c.l.b16 %v1042
    %v1146 = vunpack.c.l.b16 %v1043
    %v1147 = vunpack.c.l.b16 %v1044
    %v1148 = vunpack.c.l.b16 %v1045
    %v1149 = vunpack.c.l.b16 %v1046
    %v1150 = vunpack.c.l.b16 %v1047
    %v1151 = vunpack.c.l.b16 %v1048
    %v1152 = vunpack.c.l.b16 %v1049
    %v1153 = vunpack.c.l.b16 %v1050
    %v1154 = vunpack.c.l.b16 %v1051
    %v1155 = vunpack.c.l.b16 %v1052
    %v1156 = vunpack.c.l.b16 %v1053
    %v1157 = vunpack.c.l.b16 %v1054
    %v1158 = vunpack.c.l.b16 %v1055
    %v1159 = vunpack.c.l.b16 %v1056
    %v1160 = vunpack.c.l.b16 %v1057
    %v1161 = vunpack.c.l.b16 %v1058
    %v1162 = vunpack.c.l.b16 %v1059
    %v1163 = vunpack.c.l.b16 %v1060
    %v1164 = vunpack.c.l.b16 %v1061
    %v1165 = vunpack.c.l.b16 %v1062
    %v1166 = vunpack.c.l.b16 %v1063
    %v1167 = vunpack.c.l.b16 %v1064
    %v1168 = vunpack.c.l.b16 %v1065
    %v1169 = vunpack.c.l.b16 %v1066
    %v1170 = vunpack.c.l.b16 %v1067
    %v1171 = vunpack.c.l.b16 %v1068
    %v1172 = vunpack.c.l.b16 %v1069
    %v1173 = vunpack.c.l.b16 %v1070
    %v1174 = vunpack.c.l.b16 %v1071
    %v1175 = vunpack.c.l.b16 %v1072
    %v1176 = vunpack.c.l.b16 %v1073
    %v1177 = vunpack.c.l.b16 %v1074
    %v1178 = vunpack.c.l.b16 %v1075
    %v1179 = vunpack.c.l.b16 %v1076
    %v1180 = vpack.c.b16 %v1133, %v1132
    %v1181 = vpack.c.b16 %v1135, %v1134
    %v1182 = vpack.c.b16 %v1137, %v1136
    %v1183 = vpack.c.b16 %v1139, %v1138
    %v1184 = vpack.c.b16 %v1141, %v1140
    %v1185 = vpack.c.b16 %v1143, %v1142
    %v1186 = vpack.c.b16 %v1145, %v1144
    %v1187 = vpack.c.b16 %v1147, %v1146
    %v1188 = vpack.c.b16 %v1149, %v1148
    %v1189 = vpack.c.b16 %v1151, %v1150
    %v1190 = vpack.c.b16 %v1153, %v1152
    %v1191 = vpack.c.b16 %v1155, %v1154
    %v1192 = vpack.c.b16 %v1157, %v1156
    %v1193 = vpack.c.b16 %v1159, %v1158
    %v1194 = vpack.c.b16 %v1161, %v1160
    %v1195 = vpack.c.b16 %v1163, %v1162
    %v1196 = vpack.c.b16 %v1165, %v1164
    %v1197 = vpack.c.b16 %v1167, %v1166
    %v1198 = vpack.c.b16 %v1169, %v1168
    %v1199 = vpack.c.b16 %v1171, %v1170
    %v1200 = vpack.c.b16 %v1173, %v1172
    %v1201 = vpack.c.b16 %v1175, %v1174
    %v1202 = vpack.c.b16 %v1177, %v1176
    %v1203 = vpack.c.b16 %v1179, %v1178
    %1228 = vmatprep.subr.bf16.mxu0 0
    %1229 = vmatpush1.bf16.msra.mxu0 %v1180
    %1230 = vmatprep.subr.bf16.mxu0 0
    %1231 = vmatpush1.bf16.msra.mxu0 %v1181
    %1232 = vmatprep.subr.bf16.mxu0 0
    %1233 = vmatpush1.bf16.msra.mxu0 %v1182
    %1234 = vmatprep.subr.bf16.mxu0 0
    %1235 = vmatpush1.bf16.msra.mxu0 %v1183
    %1236 = vmatprep.subr.bf16.mxu0 0
    %1237 = vmatpush1.bf16.msra.mxu0 %v1184
    %1238 = vmatprep.subr.bf16.mxu0 0
    %1239 = vmatpush1.bf16.msra.mxu0 %v1185
    %1240 = vmatprep.subr.bf16.mxu0 0
    %1241 = vmatpush1.bf16.msra.mxu0 %v1186
    %1242 = vmatprep.subr.bf16.mxu0 0
    %1243 = vmatpush1.bf16.msra.mxu0 %v1187
    %1244 = vmatprep.subr.bf16.mxu0 0
    %1245 = vmatpush1.bf16.msra.mxu0 %v1188
    %1246 = vmatprep.subr.bf16.mxu0 0
    %1247 = vmatpush1.bf16.msra.mxu0 %v1189
    %1248 = vmatprep.subr.bf16.mxu0 0
    %1249 = vmatpush1.bf16.msra.mxu0 %v1190
    %1250 = vmatprep.subr.bf16.mxu0 0
    %1251 = vmatpush1.bf16.msra.mxu0 %v1191
    %1252 = vmatprep.subr.bf16.mxu0 0
    %1253 = vmatpush1.bf16.msra.mxu0 %v1192
    %1254 = vmatprep.subr.bf16.mxu0 0
    %1255 = vmatpush1.bf16.msra.mxu0 %v1193
    %1256 = vmatprep.subr.bf16.mxu0 0
    %1257 = vmatpush1.bf16.msra.mxu0 %v1194
    %1258 = vmatprep.subr.bf16.mxu0 0
    %1259 = vmatpush1.bf16.msra.mxu0 %v1195
    %1260 = vmatprep.mubr.bf16.mxu0 %v1027
    %1261 = vmatmul.mubr.bf16.gmra.mrb[0].mxu0 %v1026
    %v1262 = vpop.f32.mrb[0].mxu0
    %v1263 = vadd.f32 %v1082, %v1262
    %v1264 = vpop.f32.mrb[0].mxu0
    %v1265 = vpop.f32.mrb[0].mxu0
    %v1266 = vpop.f32.mrb[0].mxu0
    %1267 = vdwg.mxu0
    %1268 = vmatprep.subr.bf16.mxu0 0
    %1269 = vmatpush1.bf16.msra.mxu0 %v1196
    %1270 = vmatprep.subr.bf16.mxu0 0
    %1271 = vmatpush1.bf16.msra.mxu0 %v1197
    %1272 = vmatprep.subr.bf16.mxu0 0
    %1273 = vmatpush1.bf16.msra.mxu0 %v1198
    %1274 = vmatprep.subr.bf16.mxu0 0
    %1275 = vmatpush1.bf16.msra.mxu0 %v1199
    %1276 = vmatprep.subr.bf16.mxu0 0
    %1277 = vmatpush1.bf16.msra.mxu0 %v1200
    %1278 = vmatprep.subr.bf16.mxu0 0
    %1279 = vmatpush1.bf16.msra.mxu0 %v1201
    %1280 = vmatprep.subr.bf16.mxu0 0
    %1281 = vmatpush1.bf16.msra.mxu0 %v1202
    %1282 = vmatprep.subr.bf16.mxu0 0
    %1283 = vmatpush1.bf16.msra.mxu0 %v1203
    %1284 = vmatprep.subr.bf16.mxu0 0
    %1285 = vmatpush1.bf16.msra.mxu0 0
    %1286 = vmatprep.subr.bf16.mxu0 0
    %1287 = vmatpush1.bf16.msra.mxu0 0
    %1288 = vmatprep.subr.bf16.mxu0 0
    %1289 = vmatpush1.bf16.msra.mxu0 0
    %1290 = vmatprep.subr.bf16.mxu0 0
    %1291 = vmatpush1.bf16.msra.mxu0 0
    %1292 = vmatprep.subr.bf16.mxu0 0
    %1293 = vmatpush1.bf16.msra.mxu0 0
    %1294 = vmatprep.subr.bf16.mxu0 0
    %1295 = vmatpush1.bf16.msra.mxu0 0
    %1296 = vmatprep.subr.bf16.mxu0 0
    %1297 = vmatpush1.bf16.msra.mxu0 0
    %1298 = vmatprep.subr.bf16.mxu0 0
    %1299 = vmatpush1.bf16.msra.mxu0 0
    %1300 = vmatprep.mubr.bf16.mxu0 0
    %1301 = vmatmul.mubr.bf16.gmra.mrb[0].mxu0 %v1028
    %v1302 = vpop.f32.mrb[0].mxu0
    %v1303 = vadd.f32 %v1263, %v1302
    %v1304 = vpop.f32.mrb[0].mxu0
    %v1305 = vpop.f32.mrb[0].mxu0
    %v1306 = vpop.f32.mrb[0].mxu0
    %1307 = vdwg.mxu0
    %v1308 = vtanh.pop %v1303
    %v1309 = vpack.c.bf16 %v1308, %v1308
    %1310 = vst [vmem:[%s7] sm:$0xf] %v1309
    // Predicated region
    $region38: #{actor_forward.1} parent=1 // pred_check
      _
    $region39: #{actor_forward.1} parent=1 // pred_check_branch
      %1312 = sbr.rel (0) target = $region41
    $region40: #{actor_forward.1} parent=1 // pred_region
      _
    $region41: #{actor_forward.1} parent=1 // pred_fallthru
      _
    // Predicated region
    $region42: #{actor_forward.1} parent=1 // pred_check
      _
    $region43: #{actor_forward.1} parent=1 // pred_check_branch
      %1314 = sbr.rel (0) target = $region45
    $region44: #{actor_forward.1} parent=1 // pred_region
      _
    $region45: #{actor_forward.1} parent=1 // pred_fallthru
      _
    %1315 = vsyncpa [#allocation3], 1
    %1316 = vsyncpa [#allocation5], 1

</llo_original>
